<compile_context>
chip_gen: v5e
topology: v5e:2x2
jax: 0.10.0
libtpu: 0.0.40
codegen_flags: <defaults>
</compile_context>

<pallas_src>
import math
import functools

import jax
import jax.numpy as jnp
from jax import lax
from jax.experimental import pallas as pl
from jax.experimental.pallas import tpu as pltpu


# ----------------------------------------------------------------------------
# helpers
# ----------------------------------------------------------------------------
def _pick_tile(dim, preferred, align):
    """Largest multiple of `align` that is <= `preferred` and divides `dim`;
    falls back to the full dim (always a legal Pallas block)."""
    if dim <= preferred:
        return dim
    t = (preferred // align) * align
    while t >= align:
        if dim % t == 0:
            return t
        t -= align
    return dim


def _vmem_limit_bytes(block_bytes, scratch_bytes=0):
    """Explicit scoped-VMEM budget: double-buffered blocks + scratch, with
    generous headroom, capped at 64 MiB (v7x physical)."""
    need = 2 * block_bytes + scratch_bytes
    return int(min(64 * 1024 * 1024, max(2 * need + (2 << 20), 8 << 20)))


# ----------------------------------------------------------------------------
# Kernel 1: tiled dense projection  y = x @ W + b   (W stored as (d_in, d_out))
# ----------------------------------------------------------------------------
def _linear_kernel(x_ref, w_ref, b_ref, o_ref, acc_ref):
    # Grid = (M tiles, N tiles, K tiles); K innermost ("arbitrary").
    @pl.when(pl.program_id(2) == 0)
    def _init():
        acc_ref[...] = jnp.zeros_like(acc_ref)

    # bf16 MXU matmul with f32 accumulation (weights already stored bf16).
    acc_ref[...] += jnp.dot(x_ref[...].astype(jnp.bfloat16), w_ref[...],
                            preferred_element_type=jnp.float32)

    @pl.when(pl.program_id(2) == pl.num_programs(2) - 1)
    def _finalize():
        o_ref[...] = (acc_ref[...] + b_ref[...]).astype(o_ref.dtype)


def linear(x2d, w, b, *, tm=512, tn=512, tk=512):
    """x2d: (M, K) f32, w: (K, N) bf16 [pre-transposed vs. torch], b: (N,) f32."""
    m, k = x2d.shape
    n = w.shape[1]
    tm = _pick_tile(m, tm, 8)
    tn = _pick_tile(n, tn, 128)
    tk = _pick_tile(k, tk, 128)      # tk == K for d_model=512 -> single K step
    grid = (m // tm, n // tn, k // tk)

    block_bytes = (tm * tk * x2d.dtype.itemsize      # x tile
                   + tk * tn * w.dtype.itemsize       # w tile
                   + tn * 4                           # bias tile
                   + tm * tn * x2d.dtype.itemsize)    # out tile
    scratch_bytes = tm * tn * 4                       # f32 accumulator

    return pl.pallas_call(
        _linear_kernel,
        out_shape=jax.ShapeDtypeStruct((m, n), x2d.dtype),
        grid_spec=pltpu.PrefetchScalarGridSpec(
            num_scalar_prefetch=0,
            grid=grid,
            in_specs=[
                pl.BlockSpec((tm, tk), lambda i, j, kk: (i, kk)),
                pl.BlockSpec((tk, tn), lambda i, j, kk: (kk, j)),
                pl.BlockSpec((1, tn), lambda i, j, kk: (0, j)),
            ],
            out_specs=pl.BlockSpec((tm, tn), lambda i, j, kk: (i, j)),
            scratch_shapes=[pltpu.VMEM((tm, tn), jnp.float32)],
        ),
        compiler_params=pltpu.CompilerParams(
            dimension_semantics=("parallel", "parallel", "arbitrary"),
            vmem_limit_bytes=_vmem_limit_bytes(block_bytes, scratch_bytes)),
    )(x2d, w, b.reshape(1, n))


# ----------------------------------------------------------------------------
# Kernel 2: attention, tiled over (batch, Lq tiles); heads looped in-kernel
# ----------------------------------------------------------------------------
def _mha_body(q, k, v, a_ref, p_ref, acc_ref, *, n_heads, d_key, scale):
    """q: (tq, D), k/v: (Lk, D); a_ref: (tq, D); p_ref: (H, tq, Lk);
    acc_ref: (tq, D) f32 VMEM scratch for the merged head outputs."""
    qb = q.astype(jnp.bfloat16)
    kb = k.astype(jnp.bfloat16)
    vb = v.astype(jnp.bfloat16)
    for h in range(n_heads):                 # static unroll; lane slices
        lo = h * d_key
        qh = qb[:, lo:lo + d_key]
        kh = kb[:, lo:lo + d_key]
        vh = vb[:, lo:lo + d_key]
        # scores = qh @ kh^T (contract the dk dims; same pattern as the
        # reference flash kernel's einsum 'qd,kd->qk'), bf16 MXU -> f32.
        s = lax.dot_general(qh, kh, (((1,), (1,)), ((), ())),
                            preferred_element_type=jnp.float32) * scale
        # TODO(synk): additive/boolean mask (masked_fill -1e10) would go here.
        m = jnp.max(s, axis=-1, keepdims=True)
        e = jnp.exp(s - m)
        denom = jnp.sum(e, axis=-1, keepdims=True)
        p = e / denom                        # exact softmax (returned tensor)
        p_ref[h] = p.astype(p_ref.dtype)
        # Write this head's output into its lane range of the scratch now
        # (bounds live ranges; single lane-dense store at the end).
        acc_ref[:, lo:lo + d_key] = jnp.dot(
            p.astype(jnp.bfloat16), vh, preferred_element_type=jnp.float32)
    a_ref[...] = acc_ref[...].astype(a_ref.dtype)


def _attention_kernel(q_ref, k_ref, v_ref, a_ref, p_ref, acc_ref,
                      *, n_heads, d_key, scale):
    _mha_body(q_ref[...], k_ref[...], v_ref[...], a_ref, p_ref, acc_ref,
              n_heads=n_heads, d_key=d_key, scale=scale)


def _attention_fused_kernel(qkvq_ref, qkvkv_ref, a_ref, p_ref, acc_ref,
                            *, n_heads, d_key, d_model, scale):
    # Fused (tq, 3D)/(Lk, 3D) blocks: Q/K/V split = static in-VMEM lane slices.
    q = qkvq_ref[:, 0:d_model]
    k = qkvkv_ref[:, d_model:2 * d_model]
    v = qkvkv_ref[:, 2 * d_model:3 * d_model]
    _mha_body(q, k, v, a_ref, p_ref, acc_ref,
              n_heads=n_heads, d_key=d_key, scale=scale)


def _attention_call(kernel, inputs, in_specs, in_block_elems, *,
                    B, Lq, Lk, D, n_heads, tq, out_dtype, probs_dtype):
    nq = Lq // tq
    a_spec = pl.BlockSpec((pl.Squeezed(), tq, D), lambda b, i: (b, i, 0))
    p_spec = pl.BlockSpec((pl.Squeezed(), n_heads, tq, Lk),
                          lambda b, i: (b, 0, i, 0))

    block_bytes = (in_block_elems * 4
                   + tq * D * 4
                   + n_heads * tq * Lk * jnp.dtype(probs_dtype).itemsize)
    scratch_bytes = tq * D * 4

    return pl.pallas_call(
        kernel,
        out_shape=(
            jax.ShapeDtypeStruct((B, Lq, D), out_dtype),
            jax.ShapeDtypeStruct((B, n_heads, Lq, Lk), probs_dtype),
        ),
        grid_spec=pltpu.PrefetchScalarGridSpec(
            num_scalar_prefetch=0,
            grid=(B, nq),
            in_specs=in_specs,
            out_specs=[a_spec, p_spec],
            scratch_shapes=[pltpu.VMEM((tq, D), jnp.float32)],
        ),
        compiler_params=pltpu.CompilerParams(
            dimension_semantics=("parallel", "parallel"),
            vmem_limit_bytes=_vmem_limit_bytes(block_bytes, scratch_bytes)),
    )(*inputs)


def attention(q, k, v, n_heads, d_key, *, tq=256, probs_dtype=jnp.float32):
    """q: (B, Lq, D), k/v: (B, Lk, D) -> (A (B, Lq, D), probs (B,H,Lq,Lk))."""
    B, Lq, D = q.shape
    Lk = k.shape[1]
    tq = _pick_tile(Lq, tq, 8)
    kern = functools.partial(_attention_kernel, n_heads=n_heads, d_key=d_key,
                             scale=1.0 / math.sqrt(d_key))
    q_spec = pl.BlockSpec((pl.Squeezed(), tq, D), lambda b, i: (b, i, 0))
    kv_spec = pl.BlockSpec((pl.Squeezed(), Lk, D), lambda b, i: (b, 0, 0))
    in_elems = tq * D + 2 * Lk * D
    return _attention_call(kern, (q, k, v), [q_spec, kv_spec, kv_spec], in_elems,
                           B=B, Lq=Lq, Lk=Lk, D=D, n_heads=n_heads, tq=tq,
                           out_dtype=q.dtype, probs_dtype=probs_dtype)


def attention_fused_qkv(qkv, n_heads, d_key, d_model, *, tq=256,
                        probs_dtype=jnp.float32):
    """qkv: (B, L, 3*D) fused projection output (self-attention path)."""
    B, L, D3 = qkv.shape
    D = d_model
    tq = _pick_tile(L, tq, 8)
    kern = functools.partial(_attention_fused_kernel, n_heads=n_heads,
                             d_key=d_key, d_model=d_model,
                             scale=1.0 / math.sqrt(d_key))
    # Two views of the SAME fused array: Q role (Lq-tiled), K/V role (full L).
    q_spec = pl.BlockSpec((pl.Squeezed(), tq, D3), lambda b, i: (b, i, 0))
    kv_spec = pl.BlockSpec((pl.Squeezed(), L, D3), lambda b, i: (b, 0, 0))
    in_elems = tq * D3 + L * D3
    return _attention_call(kern, (qkv, qkv), [q_spec, kv_spec], in_elems,
                           B=B, Lq=L, Lk=L, D=D, n_heads=n_heads, tq=tq,
                           out_dtype=qkv.dtype, probs_dtype=probs_dtype)


# ----------------------------------------------------------------------------
# MultiHeadAttention wrapper (parameters + glue in plain JAX)
# ----------------------------------------------------------------------------
class MultiHeadAttentionPallas:
    def __init__(self, d_model=512, n_heads=8, dropout=0.1, key=None,
                 probs_dtype=jnp.float32):
        assert d_model % n_heads == 0
        self.d_model = d_model
        self.n_heads = n_heads
        self.d_key = d_model // n_heads
        self.dropout = dropout                  # inference: identity
        self.probs_dtype = probs_dtype          # bf16 halves probs HBM writes
        key = jax.random.PRNGKey(0) if key is None else key
        ks = jax.random.split(key, 8)
        lim = 1.0 / math.sqrt(d_model)          # torch nn.Linear default range

        # Weights stored pre-transposed (d_in, d_out) AND in bf16: no in-kernel
        # transpose and the MXU runs at bf16 peak (f32 accumulation).
        def w(kk):
            return jax.random.uniform(kk, (d_model, d_model), jnp.float32,
                                      -lim, lim).astype(jnp.bfloat16)

        def b(kk):
            return jax.random.uniform(kk, (d_model,), jnp.float32, -lim, lim)

        self.WqT, self.bq = w(ks[0]), b(ks[1])
        self.WkT, self.bk = w(ks[2]), b(ks[3])
        self.WvT, self.bv = w(ks[4]), b(ks[5])
        self.WoT, self.bo = w(ks[6]), b(ks[7])
        # Fused QKV weight for the self-attention path (activation read once).
        self.W_qkvT = jnp.concatenate([self.WqT, self.WkT, self.WvT], axis=1)
        self.b_qkv = jnp.concatenate([self.bq, self.bk, self.bv])

    def __call__(self, query, key, value, mask=None):
        if mask is not None:
            # TODO(synk): mask path (masked_fill with -1e10) not implemented.
            raise NotImplementedError("mask is not supported")
        B, Lq, D = query.shape
        Lk = key.shape[1]

        if (query is key) and (key is value):
            # Self-attention: single fused QKV GEMM; the (B, L, 3D) result is
            # fed straight into the attention kernel (no XLA reshape/slices).
            qkv = linear(query.reshape(B * Lq, D), self.W_qkvT, self.b_qkv)
            qkv = qkv.reshape(B, Lq, 3 * D)
            A, attn_probs = attention_fused_qkv(
                qkv, self.n_heads, self.d_key, D, probs_dtype=self.probs_dtype)
        else:
            Q = linear(query.reshape(B * Lq, D), self.WqT, self.bq).reshape(B, Lq, D)
            K = linear(key.reshape(B * Lk, D), self.WkT, self.bk).reshape(B, Lk, D)
            V = linear(value.reshape(B * Lk, D), self.WvT, self.bv).reshape(B, Lk, D)
            A, attn_probs = attention(Q, K, V, self.n_heads, self.d_key,
                                      probs_dtype=self.probs_dtype)

        output = linear(A.reshape(B * Lq, D), self.WoT, self.bo).reshape(B, Lq, D)
        return output, attn_probs


# ----------------------------------------------------------------------------
# Pure-JAX reference (f32 math on the same stored weights)
# ----------------------------------------------------------------------------
def reference(mha, query, key, value):
    Wq = mha.WqT.astype(jnp.float32)
    Wk = mha.WkT.astype(jnp.float32)
    Wv = mha.WvT.astype(jnp.float32)
    Wo = mha.WoT.astype(jnp.float32)
    Q = query @ Wq + mha.bq
    K = key @ Wk + mha.bk
    V = value @ Wv + mha.bv
    B, Lq, D = query.shape
    Lk = key.shape[1]
    H, dk = mha.n_heads, mha.d_key
    Qh = Q.reshape(B, Lq, H, dk).transpose(0, 2, 1, 3)
    Kh = K.reshape(B, Lk, H, dk).transpose(0, 2, 1, 3)
    Vh = V.reshape(B, Lk, H, dk).transpose(0, 2, 1, 3)
    s = jnp.einsum("bhqd,bhkd->bhqk", Qh, Kh) / math.sqrt(dk)
    p = jax.nn.softmax(s, axis=-1)
    A = jnp.einsum("bhqk,bhkd->bhqd", p, Vh)
    A = A.transpose(0, 2, 1, 3).reshape(B, Lq, D)
    out = A @ Wo + mha.bo
    return out, p


if __name__ == "__main__":
    # Small shapes consistent with the module: batch=2, seq=8, d_model=32, heads=4
    B, L, D, H = 2, 8, 32, 4
    root = jax.random.PRNGKey(0)
    k_q, k_k, k_v, k_p = jax.random.split(root, 4)
    query = jax.random.normal(k_q, (B, L, D), jnp.float32)
    key = jax.random.normal(k_k, (B, L, D), jnp.float32)
    value = jax.random.normal(k_v, (B, L, D), jnp.float32)

    mha = MultiHeadAttentionPallas(d_model=D, n_heads=H, dropout=0.1, key=k_p)

    # Kernel runs the matmuls in bf16 (f32 accumulation); the reference runs
    # f32 math on the same bf16-stored weights -> mixed-precision tolerance.
    TOL = dict(atol=2e-2, rtol=2e-2)

    # 1) Cross-attention-style call (distinct q/k/v tensors, unfused projections).
    out, probs = mha(query, key, value, mask=None)
    out = jax.block_until_ready(out)
    probs = jax.block_until_ready(probs)
    ref_out, ref_probs = reference(mha, query, key, value)
    assert out.shape == (B, L, D)
    assert probs.shape == (B, H, L, L)
    assert jnp.allclose(out, ref_out, **TOL)
    assert jnp.allclose(probs, ref_probs, **TOL)

    # 2) Self-attention call (shared tensor) exercises the fused-QKV path.
    out2, probs2 = mha(query, query, query, mask=None)
    out2 = jax.block_until_ready(out2)
    probs2 = jax.block_until_ready(probs2)
    ref_out2, ref_probs2 = reference(mha, query, query, query)
    assert jnp.allclose(out2, ref_out2, **TOL)
    assert jnp.allclose(probs2, ref_probs2, **TOL)

    print("KERNEL_OK")
</pallas_src>

<mosaic_0001>
module attributes {stable_mosaic.version = 11 : i64} {
  func.func @_linear_kernel(%arg0: i32, %arg1: i32, %arg2: i32, %arg3: memref<16x32xf32, #tpu.memory_space<vmem>>, %arg4: memref<32x32xbf16, #tpu.memory_space<vmem>>, %arg5: memref<1x32xf32, #tpu.memory_space<vmem>>, %arg6: memref<16x32xf32, #tpu.memory_space<vmem>>, %arg7: memref<16x32xf32, #tpu.memory_space<vmem>>) attributes {dimension_semantics = [#tpu.dimension_semantics<parallel>, #tpu.dimension_semantics<parallel>, #tpu.dimension_semantics<arbitrary>], iteration_bounds = array<i64: 1, 1, 1>, scalar_prefetch = 0 : i64, scratch_operands = 1 : i64, tpu.core_type = #tpu.core_type<tc>, window_params = [{transform_indices = @transform_0, window_bounds = array<i64: 16, 32>}, {transform_indices = @transform_1, window_bounds = array<i64: 32, 32>}, {transform_indices = @transform_2, window_bounds = array<i64: 1, 32>}, {transform_indices = @transform_3, window_bounds = array<i64: 16, 32>}]} {
    %c0_i32 = arith.constant 0 : i32
    %0 = arith.cmpi eq, %arg2, %c0_i32 : i32
    %1 = arith.extui %0 : i1 to i32
    %c0_i32_0 = arith.constant 0 : i32
    %2 = arith.cmpi ne, %1, %c0_i32_0 : i32
    scf.if %2 {
      %cst_10 = arith.constant 0.000000e+00 : f32
      %13 = vector.broadcast %cst_10 : f32 to vector<16x32xf32>
      %c0_11 = arith.constant 0 : index
      %c0_12 = arith.constant 0 : index
      %14 = vector.load %arg7[%c0_11, %c0_12] : memref<16x32xf32, #tpu.memory_space<vmem>>, vector<16x32xf32>
      tpu.vector_store %arg7[%c0_11, %c0_12], %13 {strides = array<i32>} : memref<16x32xf32, #tpu.memory_space<vmem>>, vector<16x32xf32>,
    } else {
    }
    %c0 = arith.constant 0 : index
    %c0_1 = arith.constant 0 : index
    %3 = vector.load %arg7[%c0, %c0_1] : memref<16x32xf32, #tpu.memory_space<vmem>>, vector<16x32xf32>
    %c0_2 = arith.constant 0 : index
    %c0_3 = arith.constant 0 : index
    %4 = vector.load %arg3[%c0_2, %c0_3] : memref<16x32xf32, #tpu.memory_space<vmem>>, vector<16x32xf32>
    %5 = arith.truncf %4 : vector<16x32xf32> to vector<16x32xbf16>
    %c0_4 = arith.constant 0 : index
    %c0_5 = arith.constant 0 : index
    %6 = vector.load %arg4[%c0_4, %c0_5] : memref<32x32xbf16, #tpu.memory_space<vmem>>, vector<32x32xbf16>
    %cst = arith.constant dense<0.000000e+00> : vector<16x32xf32>
    %7 = tpu.matmul %5, %6, %cst {dimension_numbers = #tpu.dot_dimension_numbers<[1], [0], [0], [1], [0, 0, 1, 1], [], []>} : vector<16x32xbf16>, vector<32x32xbf16>, vector<16x32xf32> -> vector<16x32xf32>
    %8 = arith.addf %3, %7 : vector<16x32xf32>
    %c0_6 = arith.constant 0 : index
    %c0_7 = arith.constant 0 : index
    %9 = vector.load %arg7[%c0_6, %c0_7] : memref<16x32xf32, #tpu.memory_space<vmem>>, vector<16x32xf32>
    tpu.vector_store %arg7[%c0_6, %c0_7], %8 {strides = array<i32>} : memref<16x32xf32, #tpu.memory_space<vmem>>, vector<16x32xf32>,
    %c0_i32_8 = arith.constant 0 : i32
    %10 = arith.cmpi eq, %arg2, %c0_i32_8 : i32
    %11 = arith.extui %10 : i1 to i32
    %c0_i32_9 = arith.constant 0 : i32
    %12 = arith.cmpi ne, %11, %c0_i32_9 : i32
    scf.if %12 {
      %c0_10 = arith.constant 0 : index
      %c0_11 = arith.constant 0 : index
      %13 = vector.load %arg7[%c0_10, %c0_11] : memref<16x32xf32, #tpu.memory_space<vmem>>, vector<16x32xf32>
      %c0_12 = arith.constant 0 : index
      %c0_13 = arith.constant 0 : index
      %14 = vector.load %arg5[%c0_12, %c0_13] : memref<1x32xf32, #tpu.memory_space<vmem>>, vector<1x32xf32>
      %15 = vector.broadcast %14 : vector<1x32xf32> to vector<16x32xf32>
      %16 = arith.addf %13, %15 : vector<16x32xf32>
      %c0_14 = arith.constant 0 : index
      %c0_15 = arith.constant 0 : index
      %17 = vector.load %arg6[%c0_14, %c0_15] : memref<16x32xf32, #tpu.memory_space<vmem>>, vector<16x32xf32>
      tpu.vector_store %arg6[%c0_14, %c0_15], %16 {strides = array<i32>} : memref<16x32xf32, #tpu.memory_space<vmem>>, vector<16x32xf32>,
    } else {
    }
    return
  }
  func.func @transform_0(%arg0: i32, %arg1: i32, %arg2: i32) -> (i32, i32) {
    %c0_i32 = arith.constant 0 : i32
    return %arg0, %arg2 : i32, i32
  }
  func.func @transform_1(%arg0: i32, %arg1: i32, %arg2: i32) -> (i32, i32) {
    %c0_i32 = arith.constant 0 : i32
    return %arg2, %arg1 : i32, i32
  }
  func.func @transform_2(%arg0: i32, %arg1: i32, %arg2: i32) -> (i32, i32) {
    %c0_i32 = arith.constant 0 : i32
    %c0_i32_0 = arith.constant 0 : i32
    return %c0_i32, %arg1 : i32, i32
  }
  func.func @transform_3(%arg0: i32, %arg1: i32, %arg2: i32) -> (i32, i32) {
    %c0_i32 = arith.constant 0 : i32
    return %arg0, %arg1 : i32, i32
  }
}

</mosaic_0001>

<llo_original>
// kernel: tpu_custom_call.1
$region0: #{tpu_custom_call.1}
  #allocation0 [shape = 'u32[]', space=smem, size = 0x4, offset = 0x4, fixed_abs, tag = 'smem constant byte address 0x4 - core index']
  #allocation1 [shape = 'u32[72,128]{1,0:T(1,128)}', space=vmem, size = 0x9000, scoped, tag = 'internal scratch']
  #allocation2 [shape = 'f32[16,32]{1,0:T(8,128)}', space=vmem, size = 0x2000, scoped, tag = 'scratch operand']
  %s0 = inlined_call_operand.hbm [shape: f32[16,32], index: 0, kind: input, shape index: {}]
  %s1 = inlined_call_operand.hbm [shape: bf16[32,32], index: 1, kind: input, shape index: {}]
  %s2 = inlined_call_operand.vmem [shape: f32[1,32], index: 2, kind: input, shape index: {}]
  %s3 = inlined_call_operand.hbm [shape: f32[16,32], index: 3, kind: output, shape index: {}]
  %s4 = sld [smem:[#allocation0]]
  $region38: #{tpu_custom_call.1} parent=0
    _
  %s6 = ssub.s32 1, %s4
  %s7 = scalar_select 0, %s6, %s4
  $region1: #{tpu_custom_call.1} parent=0
    #allocation3 [shape = 'u8[8192]{0}', space=vmem, size = 0x2000, scoped, tag = 'input window, operand 0, single buffered']
    #allocation4 [shape = 's32[1]{0}', space=sflag, size = 0x4, scoped, tag = 'scoped memory for tpu_custom_call.1']
    #allocation5 [shape = 's32[1]{0}', space=sflag, size = 0x4, scoped, tag = 'scoped memory for tpu_custom_call.1']
    #allocation6 [shape = 'u8[8192]{0}', space=vmem, size = 0x2000, scoped, tag = 'input window, operand 1, single buffered']
    #allocation7 [shape = 's32[1]{0}', space=sflag, size = 0x4, scoped, tag = 'scoped memory for tpu_custom_call.1']
    #allocation8 [shape = 'u8[8192]{0}', space=vmem, size = 0x2000, scoped, tag = 'output window, operand 0, single buffered']
    %8 = vsyncpa [#allocation4], 0
    %9 = vsyncpa [#allocation7], 0
    %10 = vsyncpa [#allocation5], 0
    // Predicated region
    $region2: #{tpu_custom_call.1} parent=1 // pred_check
      _
    $region3: #{tpu_custom_call.1} parent=1 // pred_check_branch
      %12 = sbr.rel (0) target = $region5
    $region4: #{tpu_custom_call.1} parent=1 // pred_region
      %14 = vsyncadd [#allocation4], 0
      %s15 = sshll.u32 %s0, 4
      %s16 = int_to_ptr.hbm [resolvable:$true] %s15
      %s17 = sshll.u32 [#allocation3], 4
      %s18 = int_to_ptr.vmem [resolvable:$true] %s17
      %23 = dma.hbm_to_vmem [thread:$0]  %s16, 256, %s18, [#allocation4], 128, 128, 8
    $region5: #{tpu_custom_call.1} parent=1 // pred_fallthru
      _
    // Predicated region
    $region6: #{tpu_custom_call.1} parent=1 // pred_check
      _
    $region7: #{tpu_custom_call.1} parent=1 // pred_check_branch
      %25 = sbr.rel (0) target = $region9
    $region8: #{tpu_custom_call.1} parent=1 // pred_region
      %27 = vsyncadd [#allocation7], 0
      %s28 = sshll.u32 %s1, 4
      %s29 = int_to_ptr.hbm [resolvable:$true] %s28
      %s30 = sshll.u32 [#allocation6], 4
      %s31 = int_to_ptr.vmem [resolvable:$true] %s30
      %36 = dma.hbm_to_vmem [thread:$0]  %s29, 256, %s31, [#allocation7], 64, 64, 4
    $region9: #{tpu_custom_call.1} parent=1 // pred_fallthru
      _
    // Predicated region
    $region10: #{tpu_custom_call.1} parent=1 // pred_check
      _
    $region11: #{tpu_custom_call.1} parent=1 // pred_check_branch
      %38 = sbr.rel (0) target = $region13
    $region12: #{tpu_custom_call.1} parent=1 // pred_region
      _
    $region13: #{tpu_custom_call.1} parent=1 // pred_fallthru
      _
    // Predicated region
    $region14: #{tpu_custom_call.1} parent=1 // pred_check
      _
    $region15: #{tpu_custom_call.1} parent=1 // pred_check_branch
      %40 = sbr.rel (0) target = $region17
    $region16: #{tpu_custom_call.1} parent=1 // pred_region
      %42 = dma.done [#allocation4], 256
    $region17: #{tpu_custom_call.1} parent=1 // pred_fallthru
      _
    // Predicated region
    $region18: #{tpu_custom_call.1} parent=1 // pred_check
      _
    $region19: #{tpu_custom_call.1} parent=1 // pred_check_branch
      %44 = sbr.rel (0) target = $region21
    $region20: #{tpu_custom_call.1} parent=1 // pred_region
      %46 = dma.done [#allocation7], 256
    $region21: #{tpu_custom_call.1} parent=1 // pred_fallthru
      _
    %p48 = scmp.eq.s32.totalorder 0, 0
    // Predicated region
    $region22: #{tpu_custom_call.1} parent=1 // pred_check
      %p49 = pneg %p48
    $region23: #{tpu_custom_call.1} parent=1 // pred_check_branch
      %51 = sbr.rel (%p49) target = $region25
    $region24: #{tpu_custom_call.1} parent=1 // pred_region
      %vm52 = vcmask 261120
      %53 = vst.msk [vmem:[#allocation2] sm:$0xff] %vm52, 0.0
      %54 = vst.msk [vmem:[#allocation2 + $0x8] sm:$0xff] %vm52, 0.0
    $region25: #{tpu_custom_call.1} parent=1 // pred_fallthru
      _
    %v55 = vld [vmem:[#allocation2] sm:$0xff]
    %v56 = vld [vmem:[#allocation2 + $0x8] sm:$0xff]
    %v57 = vld [vmem:[#allocation3] sm:$0xff]
    %v58 = vld [vmem:[#allocation3 + $0x8] sm:$0xff]
    %v59 = vpack.c.bf16 %v58, %v57
    %v60 = vld [vmem:[#allocation6] sm:$0xf]
    %v61 = vld [vmem:[#allocation6 + $0x4] sm:$0xf]
    %v62 = vld [vmem:[#allocation6 + $0x8] sm:$0xf]
    %v63 = vld [vmem:[#allocation6 + $0xc] sm:$0xf]
    %v68 = vunpack.c.l.b16 %v60
    %v69 = vunpack.c.l.b16 %v61
    %v70 = vunpack.c.l.b16 %v62
    %v71 = vunpack.c.l.b16 %v63
    %v72 = vpack.c.b16 %v69, %v68
    %v73 = vpack.c.b16 %v71, %v70
    %vm76 = vcmask 261120
    %v78 = vsel %vm76, %v59, 0
    %80 = vmatpush.bf16.msra.mxu0 0
    %81 = vmatpush.bf16.msra.mxu0 0
    %82 = vmatpush.bf16.msra.mxu0 0
    %83 = vmatpush.bf16.msra.mxu0 0
    %84 = vmatpush.bf16.msra.mxu0 0
    %85 = vmatpush.bf16.msra.mxu0 0
    %86 = vmatpush.bf16.msra.mxu0 %v73
    %87 = vmatpush.bf16.msra.mxu0 %v72
    %88 = vmatmul.bf16.gmra.mxu0 %v78
    %v89 = vpop.f32.mrf.mxu0
    %v90 = vadd.f32 0.0, %v89
    %v91 = vpop.f32.mrf.mxu0
    %v92 = vadd.f32 0.0, %v91
    %93 = vdwg.mxu0
    %v94 = vadd.f32 %v55, %v90
    %v95 = vadd.f32 %v56, %v92
    %96 = vst.msk [vmem:[#allocation2] sm:$0xff] %vm76, %v94
    %97 = vst.msk [vmem:[#allocation2 + $0x8] sm:$0xff] %vm76, %v95
    // Predicated region
    $region26: #{tpu_custom_call.1} parent=1 // pred_check
      %p98 = pneg %p48
    $region27: #{tpu_custom_call.1} parent=1 // pred_check_branch
      %100 = sbr.rel (%p98) target = $region29
    $region28: #{tpu_custom_call.1} parent=1 // pred_region
      %v101 = vld [vmem:[#allocation2] sm:$0xff]
      %v102 = vld [vmem:[#allocation2 + $0x8] sm:$0xff]
      %v103 = vld [vmem:[%s2] sm:$0x1]
      %v105 = vperm.slane %v103, 0
      %v107 = vadd.f32 %v101, %v105
      %v108 = vadd.f32 %v102, %v105
      %109 = vst.msk [vmem:[#allocation8] sm:$0xff] %vm76, %v107
      %110 = vst.msk [vmem:[#allocation8 + $0x8] sm:$0xff] %vm76, %v108
    $region29: #{tpu_custom_call.1} parent=1 // pred_fallthru
      _
    // Predicated region
    $region30: #{tpu_custom_call.1} parent=1 // pred_check
      _
    $region31: #{tpu_custom_call.1} parent=1 // pred_check_branch
      %112 = sbr.rel (0) target = $region33
    $region32: #{tpu_custom_call.1} parent=1 // pred_region
      %114 = vsyncadd [#allocation5], 0
      %s115 = sshll.u32 [#allocation8], 4
      %s116 = int_to_ptr.vmem [resolvable:$true] %s115
      %s117 = sshll.u32 %s3, 4
      %s118 = int_to_ptr.hbm [resolvable:$true] %s117
      %123 = dma.vmem_to_hbm [thread:$0]  %s116, 256, %s118, [#allocation5], 128, 128, 8
    $region33: #{tpu_custom_call.1} parent=1 // pred_fallthru
      _
    // Predicated region
    $region34: #{tpu_custom_call.1} parent=1 // pred_check
      _
    $region35: #{tpu_custom_call.1} parent=1 // pred_check_branch
      %125 = sbr.rel (0) target = $region37
    $region36: #{tpu_custom_call.1} parent=1 // pred_region
      %127 = dma.done [#allocation5], 256
    $region37: #{tpu_custom_call.1} parent=1 // pred_fallthru
      _
    %128 = vsyncpa [#allocation4], 1
    %129 = vsyncpa [#allocation7], 1
    %130 = vsyncpa [#allocation5], 1

</llo_original>
